<compile_context>
chip_gen: v7x
topology: tpu7x:2x2x1
jax: 0.10.0
libtpu: 0.0.40
codegen_flags: <defaults>
</compile_context>

<pallas_src>
from functools import partial

import jax
import jax.numpy as jnp
from jax.experimental import pallas as pl
from jax.experimental.pallas import tpu as pltpu


def _round_up(a: int, b: int) -> int:
    return (a + b - 1) // b * b


def _patch_embed_kernel(x_ref, w_ref, b_ref, o_ref):
    # x_ref: (TN, Kp) bf16 flattened patches
    # w_ref: (Kp, TE) bf16 projection weight tile (resident across N tiles)
    # b_ref: (1, TE)  f32 bias tile
    # o_ref: (TN, TE) output tile
    acc = jnp.dot(x_ref[...], w_ref[...], preferred_element_type=jnp.float32)
    o_ref[...] = (acc + b_ref[...]).astype(o_ref.dtype)


@partial(jax.jit, static_argnames=("patch_size", "tile_n", "tile_e"))
def patch_embed(x, weight, bias, *, patch_size, tile_n=512, tile_e=256):
    """x: (B, C, H, W); weight: (E, C, P, P); bias: (E,) -> (B, num_patches, E)."""
    B, C, H, W = x.shape
    E = weight.shape[0]
    P = patch_size
    assert H % P == 0 and W % P == 0
    assert tile_n % 16 == 0 and tile_e % 128 == 0
    Gh, Gw = H // P, W // P
    num_patches = Gh * Gw
    N = B * num_patches          # rows of the patch matrix
    K = C * P * P                # contraction size

    # Lane / MXU friendly padded sizes (last dims multiples of 128).
    Kp = _round_up(K, 128)
    Ep = _round_up(E, 128)
    TE = min(tile_e, Ep)
    Ep = _round_up(Ep, TE)
    TN = min(tile_n, _round_up(N, 8))
    Np = _round_up(N, TN)
    grid_e = Ep // TE
    grid_n = Np // TN

    # --- JAX glue: patch extraction + operand layout -------------------------
    # (B,C,Gh,P,Gw,P) -> (B,Gh,Gw,C,P,P) -> (N,K); flatten order (C,kh,kw)
    # matches the Conv2d weight layout. allow_input_fusion lets XLA fuse this
    # into the kernel's input DMA instead of materializing it in HBM.
    patches = x.reshape(B, C, Gh, P, Gw, P).transpose(0, 2, 4, 1, 3, 5)
    patches = patches.reshape(N, K).astype(jnp.bfloat16)
    patches = jnp.pad(patches, ((0, Np - N), (0, Kp - K)))

    # Conv weight (E, C, P, P) -> (K, E), bf16, zero-padded to (Kp, Ep).
    w_mat = weight.reshape(E, K).T.astype(jnp.bfloat16)
    w_mat = jnp.pad(w_mat, ((0, Kp - K), (0, Ep - E)))

    b_mat = jnp.pad(bias.reshape(1, E).astype(jnp.float32), ((0, 0), (0, Ep - E)))

    # Grid: E tiles outer (slow), N tiles inner (fast) -> weight tile index is
    # constant across consecutive steps and stays resident in VMEM.
    # NOTE: K is not tiled; for very large K add a trailing "arbitrary" K grid
    # axis with an f32 VMEM accumulator, init under pl.when(k==0) and add
    # bias / cast under pl.when(k==last).
    out_full = pl.pallas_call(
        _patch_embed_kernel,
        out_shape=jax.ShapeDtypeStruct((Np, Ep), x.dtype),
        grid_spec=pltpu.PrefetchScalarGridSpec(
            num_scalar_prefetch=0,
            grid=(grid_e, grid_n),
            in_specs=[
                pl.BlockSpec((TN, Kp), lambda e, n: (n, 0)),   # patch rows
                pl.BlockSpec((Kp, TE), lambda e, n: (0, e)),   # weight (resident over n)
                pl.BlockSpec((1, TE), lambda e, n: (0, e)),    # bias tile
            ],
            out_specs=pl.BlockSpec((TN, TE), lambda e, n: (n, e)),
        ),
        compiler_params=pltpu.CompilerParams(
            dimension_semantics=("parallel", "parallel"),
            vmem_limit_bytes=64 * 1024 * 1024,
            allow_input_fusion=[True, False, False],
        ),
    )(patches, w_mat, b_mat)

    # Strip padding, restore (B, num_patches, E).
    return out_full[:N, :E].reshape(B, num_patches, E)


if __name__ == "__main__":
    # Small shapes consistent with the module: img_size=16, patch_size=4,
    # in_chans=4, embed_dim=32  ->  num_patches = (16/4)^2 = 16.
    B, C, H, W = 2, 4, 16, 16
    P = 4
    E = 32

    key = jax.random.PRNGKey(0)
    kx, kw, kb = jax.random.split(key, 3)

    x = jax.random.normal(kx, (B, C, H, W), dtype=jnp.float32)
    # Deterministic synthetic parameters (Conv2d weight shape: (E, C, P, P)).
    weight = jax.random.normal(kw, (E, C, P, P), dtype=jnp.float32) * 0.02
    bias = jax.random.normal(kb, (E,), dtype=jnp.float32) * 0.02

    out = patch_embed(x, weight, bias, patch_size=P)
    out = jax.block_until_ready(out)

    # Reference: same Conv2d-as-linear math, with operands rounded to bf16 to
    # match the kernel's MXU inputs (f32 accumulation in both).
    Gh, Gw = H // P, W // P
    patches_ref = x.reshape(B, C, Gh, P, Gw, P).transpose(0, 2, 4, 1, 3, 5)
    patches_ref = patches_ref.reshape(B * Gh * Gw, C * P * P)
    w_mat_ref = weight.reshape(E, -1).T
    ref = (patches_ref.astype(jnp.bfloat16).astype(jnp.float32)
           @ w_mat_ref.astype(jnp.bfloat16).astype(jnp.float32) + bias)
    ref = ref.reshape(B, Gh * Gw, E)

    assert out.shape == (B, Gh * Gw, E)
    assert out.dtype == x.dtype
    assert jnp.allclose(out, ref, atol=1e-3, rtol=1e-3), \
        float(jnp.max(jnp.abs(out - ref)))

    print("KERNEL_OK")
</pallas_src>

<mosaic_0001>
module attributes {stable_mosaic.version = 11 : i64} {
  func.func @_patch_embed_kernel(%arg0: i32, %arg1: i32, %arg2: memref<32x128xbf16, #tpu.memory_space<vmem>>, %arg3: memref<128x128xbf16, #tpu.memory_space<vmem>>, %arg4: memref<1x128xf32, #tpu.memory_space<vmem>>, %arg5: memref<32x128xf32, #tpu.memory_space<vmem>>) attributes {dimension_semantics = [#tpu.dimension_semantics<parallel>, #tpu.dimension_semantics<parallel>], iteration_bounds = array<i64: 1, 1>, scalar_prefetch = 0 : i64, scratch_operands = 0 : i64, tpu.core_type = #tpu.core_type<tc>, window_params = [{transform_indices = @transform_0, window_bounds = array<i64: 32, 128>}, {transform_indices = @transform_1, window_bounds = array<i64: 128, 128>}, {transform_indices = @transform_2, window_bounds = array<i64: 1, 128>}, {transform_indices = @transform_3, window_bounds = array<i64: 32, 128>}]} {
    %c0 = arith.constant 0 : index
    %c0_0 = arith.constant 0 : index
    %0 = vector.load %arg2[%c0, %c0_0] : memref<32x128xbf16, #tpu.memory_space<vmem>>, vector<32x128xbf16>
    %c0_1 = arith.constant 0 : index
    %c0_2 = arith.constant 0 : index
    %1 = vector.load %arg3[%c0_1, %c0_2] : memref<128x128xbf16, #tpu.memory_space<vmem>>, vector<128x128xbf16>
    %cst = arith.constant dense<0.000000e+00> : vector<32x128xf32>
    %2 = tpu.matmul %0, %1, %cst {dimension_numbers = #tpu.dot_dimension_numbers<[1], [0], [0], [1], [0, 0, 1, 1], [], []>} : vector<32x128xbf16>, vector<128x128xbf16>, vector<32x128xf32> -> vector<32x128xf32>
    %c0_3 = arith.constant 0 : index
    %c0_4 = arith.constant 0 : index
    %3 = vector.load %arg4[%c0_3, %c0_4] : memref<1x128xf32, #tpu.memory_space<vmem>>, vector<1x128xf32>
    %4 = vector.broadcast %3 : vector<1x128xf32> to vector<32x128xf32>
    %5 = arith.addf %2, %4 : vector<32x128xf32>
    %c0_5 = arith.constant 0 : index
    %c0_6 = arith.constant 0 : index
    %6 = vector.load %arg5[%c0_5, %c0_6] : memref<32x128xf32, #tpu.memory_space<vmem>>, vector<32x128xf32>
    tpu.vector_store %arg5[%c0_5, %c0_6], %5 {strides = array<i32>} : memref<32x128xf32, #tpu.memory_space<vmem>>, vector<32x128xf32>,
    return
  }
  func.func @transform_0(%arg0: i32, %arg1: i32) -> (i32, i32) {
    %c0_i32 = arith.constant 0 : i32
    %c0_i32_0 = arith.constant 0 : i32
    return %arg1, %c0_i32 : i32, i32
  }
  func.func @transform_1(%arg0: i32, %arg1: i32) -> (i32, i32) {
    %c0_i32 = arith.constant 0 : i32
    %c0_i32_0 = arith.constant 0 : i32
    return %c0_i32, %arg0 : i32, i32
  }
  func.func @transform_2(%arg0: i32, %arg1: i32) -> (i32, i32) {
    %c0_i32 = arith.constant 0 : i32
    %c0_i32_0 = arith.constant 0 : i32
    return %c0_i32, %arg0 : i32, i32
  }
  func.func @transform_3(%arg0: i32, %arg1: i32) -> (i32, i32) {
    %c0_i32 = arith.constant 0 : i32
    return %arg1, %arg0 : i32, i32
  }
}

</mosaic_0001>

<llo_original>
// kernel: patch_embed.2
$region0: #{patch_embed.2}
  #allocation0 [shape = 'u32[]', space=smem, size = 0x4, offset = 0x4, fixed_abs, tag = 'smem constant byte address 0x4 - core index']
  #allocation1 [shape = 'u32[144,128]{1,0:T(1,128)}', space=vmem, size = 0x12000, scoped, tag = 'internal scratch']
  #allocation2 [shape = 'u32[2048]{0}', space=vmem, size = 0x2000, scoped, tag = 'scoped memory for patch_embed.2']
  #allocation3 [shape = 'u32[2048]{0}', space=vmem, size = 0x2000, scoped, tag = 'scoped memory for patch_embed.2']
  #allocation4 [shape = 'u32[2048]{0}', space=vmem, size = 0x2000, scoped, tag = 'scoped memory for patch_embed.2']
  #allocation5 [shape = 'u32[2048]{0}', space=vmem, size = 0x2000, scoped, tag = 'scoped memory for patch_embed.2']
  #allocation6 [shape = 'u32[2048]{0}', space=vmem, size = 0x2000, scoped, tag = 'scoped memory for patch_embed.2']
  %s0 = inlined_call_operand.vmem [shape: bf16[128,128], index: 0, kind: input, shape index: {}]
  %s1 = inlined_call_operand.vmem [shape: f32[1,128], index: 1, kind: input, shape index: {}]
  %s2 = inlined_call_operand.vmem [shape: bf16[32,64], index: 2, kind: input, shape index: {}]
  %s3 = inlined_call_operand.<no memory space> [shape: bf16[], index: 3, kind: input, shape index: {}]
  %s4 = inlined_call_operand.hbm [shape: f32[32,128], index: 4, kind: output, shape index: {}]
  %s5 = sld [smem:[#allocation0]]
  $region22: #{patch_embed.2} parent=0
    _
  %s7 = ssub.s32 1, %s5
  %s8 = scalar_select 0, %s7, %s5
  %v9 = vstv %s3
  %v10 = vunpack.i.l.bf16 %v9
  %v12 = vunpack.i.h.bf16 %v9
  $region1: #{patch_embed.2} parent=0
    #allocation7 [shape = 'u8[16384]{0}', space=vmem, size = 0x4000, scoped, tag = 'output window, operand 0, single buffered']
    #allocation8 [shape = 's32[1]{0}', space=sflag, size = 0x4, scoped, tag = 'scoped memory for patch_embed.2']
    #allocation9 [shape = 'u8[8192]{0}', space=vmem, size = 0x2000, dematerialized = true, scoped, tag = 'FusionAdapter Buffer %fusion.1 = bf16[32,128]{1,0:T(8,128)(2,1)} fusion(%param_2.1, %param_3), kind=kLoop, calls=%fused_computation.2.clone, metadata={op_name="jit(patch_embed)/jit(_pad)/pad" stack_frame_id=9}']
    %14 = vsyncpa [#allocation8], 0
    // Predicated region
    $region2: #{patch_embed.2} parent=1 // pred_check
      _
    $region3: #{patch_embed.2} parent=1 // pred_check_branch
      %16 = sbr.rel (0) target = $region5
    $region4: #{patch_embed.2} parent=1 // pred_region
      _
    $region5: #{patch_embed.2} parent=1 // pred_fallthru
      _
    // Predicated region
    $region6: #{patch_embed.2} parent=1 // pred_check
      _
    $region7: #{patch_embed.2} parent=1 // pred_check_branch
      %18 = sbr.rel (0) target = $region9
    $region8: #{patch_embed.2} parent=1 // pred_region
      _
    $region9: #{patch_embed.2} parent=1 // pred_fallthru
      _
    // Predicated region
    $region10: #{patch_embed.2} parent=1 // pred_check
      _
    $region11: #{patch_embed.2} parent=1 // pred_check_branch
      %20 = sbr.rel (0) target = $region13
    $region12: #{patch_embed.2} parent=1 // pred_region
      _
    $region13: #{patch_embed.2} parent=1 // pred_fallthru
      _
    %s22 = sor.u32 255, 127
    %s23 = sand.u32 %s22, 85
    %s24 = sshrl.u32 %s23, 1
    %s25 = sor.u32 %s23, %s24
    %s26 = sand.u32 51, %s25
    %s27 = sshrl.u32 %s26, 2
    %s28 = sor.u32 %s26, %s27
    %s29 = sand.u32 15, %s28
    %v30 = vld [vmem:[%s2] sm:%s29]
    %v31 = vunpack.c.l.bf16 %v30
    %v32 = vunpack.c.h.bf16 %v30
    %v33 = vlaneseq
    %v34 = vand.u32 %v33, 127
    %vm36 = vcmp.lt.s32.totalorder %v34, 64
    %v37 = vsel %vm36, %v31, %v10
    %v38 = vpack.c.bf16 0.0, %v37
    %40 = vst [vmem:[#allocation9] sm:$0xf] %v38
    %s41 = scalar_lea.vmem %s2, 4
    %s43 = sor.u32 255, 127
    %s44 = sand.u32 %s43, 85
    %s45 = sshrl.u32 %s44, 1
    %s46 = sor.u32 %s44, %s45
    %s47 = sand.u32 51, %s46
    %s48 = sshrl.u32 %s47, 2
    %s49 = sor.u32 %s47, %s48
    %s50 = sand.u32 15, %s49
    %v51 = vld [vmem:[%s41] sm:%s50]
    %v52 = vunpack.c.l.bf16 %v51
    %v53 = vunpack.c.h.bf16 %v51
    %v54 = vlaneseq
    %v55 = vand.u32 %v54, 127
    %vm57 = vcmp.lt.s32.totalorder %v55, 64
    %v58 = vsel %vm57, %v52, %v10
    %s59 = scalar_lea.vmem [#allocation9], 4
    %v60 = vpack.c.bf16 0.0, %v58
    %62 = vst [vmem:[%s59] sm:$0xf] %v60
    %s63 = scalar_lea.vmem %s2, 8
    %s65 = sor.u32 255, 127
    %s66 = sand.u32 %s65, 85
    %s67 = sshrl.u32 %s66, 1
    %s68 = sor.u32 %s66, %s67
    %s69 = sand.u32 51, %s68
    %s70 = sshrl.u32 %s69, 2
    %s71 = sor.u32 %s69, %s70
    %s72 = sand.u32 15, %s71
    %v73 = vld [vmem:[%s63] sm:%s72]
    %v74 = vunpack.c.l.bf16 %v73
    %v75 = vunpack.c.h.bf16 %v73
    %v76 = vlaneseq
    %v77 = vand.u32 %v76, 127
    %vm79 = vcmp.lt.s32.totalorder %v77, 64
    %v80 = vsel %vm79, %v74, %v10
    %s81 = scalar_lea.vmem [#allocation9], 8
    %v82 = vpack.c.bf16 0.0, %v80
    %84 = vst [vmem:[%s81] sm:$0xf] %v82
    %s85 = scalar_lea.vmem %s2, 12
    %s87 = sor.u32 255, 127
    %s88 = sand.u32 %s87, 85
    %s89 = sshrl.u32 %s88, 1
    %s90 = sor.u32 %s88, %s89
    %s91 = sand.u32 51, %s90
    %s92 = sshrl.u32 %s91, 2
    %s93 = sor.u32 %s91, %s92
    %s94 = sand.u32 15, %s93
    %v95 = vld [vmem:[%s85] sm:%s94]
    %v96 = vunpack.c.l.bf16 %v95
    %v97 = vunpack.c.h.bf16 %v95
    %v98 = vlaneseq
    %v99 = vand.u32 %v98, 127
    %vm101 = vcmp.lt.s32.totalorder %v99, 64
    %v102 = vsel %vm101, %v96, %v10
    %s103 = scalar_lea.vmem [#allocation9], 12
    %v104 = vpack.c.bf16 0.0, %v102
    %106 = vst [vmem:[%s103] sm:$0xf] %v104
    %v108 = vld [vmem:[#allocation9] sm:$0xf]
    %v109 = vld [vmem:[#allocation9 + $0x4] sm:$0xf]
    %v110 = vld [vmem:[#allocation9 + $0x8] sm:$0xf]
    %v111 = vld [vmem:[#allocation9 + $0xc] sm:$0xf]
    %v112 = vld [vmem:[%s0] sm:$0xf]
    %v113 = vld [vmem:[%s0 + $0x4] sm:$0xf]
    %v114 = vld [vmem:[%s0 + $0x8] sm:$0xf]
    %v115 = vld [vmem:[%s0 + $0xc] sm:$0xf]
    %v116 = vld [vmem:[%s0 + $0x10] sm:$0xf]
    %v117 = vld [vmem:[%s0 + $0x14] sm:$0xf]
    %v118 = vld [vmem:[%s0 + $0x18] sm:$0xf]
    %v119 = vld [vmem:[%s0 + $0x1c] sm:$0xf]
    %v120 = vld [vmem:[%s0 + $0x20] sm:$0xf]
    %v121 = vld [vmem:[%s0 + $0x24] sm:$0xf]
    %v122 = vld [vmem:[%s0 + $0x28] sm:$0xf]
    %v123 = vld [vmem:[%s0 + $0x2c] sm:$0xf]
    %v124 = vld [vmem:[%s0 + $0x30] sm:$0xf]
    %v125 = vld [vmem:[%s0 + $0x34] sm:$0xf]
    %v126 = vld [vmem:[%s0 + $0x38] sm:$0xf]
    %v127 = vld [vmem:[%s0 + $0x3c] sm:$0xf]
    %v128 = vld [vmem:[%s1] sm:$0x1]
    %v130 = vlaneseq
    %v131 = vshrl.u32 %v130, 7
    %v132 = vsub.s32 0, %v131
    %v133 = vrot.slane %v128, %v132
    %v139 = vunpack.c.l.b16 %v108
    %v140 = vunpack.c.l.b16 %v109
    %v141 = vunpack.c.l.b16 %v110
    %v142 = vunpack.c.l.b16 %v111
    %v143 = vpack.c.b16 %v140, %v139
    %v144 = vpack.c.b16 %v142, %v141
    %v163 = vunpack.c.l.b16 %v112
    %v164 = vunpack.c.l.b16 %v113
    %v165 = vunpack.c.l.b16 %v114
    %v166 = vunpack.c.l.b16 %v115
    %v167 = vunpack.c.l.b16 %v116
    %v168 = vunpack.c.l.b16 %v117
    %v169 = vunpack.c.l.b16 %v118
    %v170 = vunpack.c.l.b16 %v119
    %v171 = vunpack.c.l.b16 %v120
    %v172 = vunpack.c.l.b16 %v121
    %v173 = vunpack.c.l.b16 %v122
    %v174 = vunpack.c.l.b16 %v123
    %v175 = vunpack.c.l.b16 %v124
    %v176 = vunpack.c.l.b16 %v125
    %v177 = vunpack.c.l.b16 %v126
    %v178 = vunpack.c.l.b16 %v127
    %v179 = vpack.c.b16 %v164, %v163
    %v180 = vpack.c.b16 %v166, %v165
    %v181 = vpack.c.b16 %v168, %v167
    %v182 = vpack.c.b16 %v170, %v169
    %v183 = vpack.c.b16 %v172, %v171
    %v184 = vpack.c.b16 %v174, %v173
    %v185 = vpack.c.b16 %v176, %v175
    %v186 = vpack.c.b16 %v178, %v177
    %195 = vmatprep.subr.bf16.mxu0 0
    %196 = vmatpush1.bf16.msra.mxu0 %v179
    %197 = vmatprep.subr.bf16.mxu0 0
    %198 = vmatpush1.bf16.msra.mxu0 %v180
    %199 = vmatprep.subr.bf16.mxu0 0
    %200 = vmatpush1.bf16.msra.mxu0 %v181
    %201 = vmatprep.subr.bf16.mxu0 0
    %202 = vmatpush1.bf16.msra.mxu0 %v182
    %203 = vmatprep.subr.bf16.mxu0 0
    %204 = vmatpush1.bf16.msra.mxu0 %v183
    %205 = vmatprep.subr.bf16.mxu0 0
    %206 = vmatpush1.bf16.msra.mxu0 %v184
    %207 = vmatprep.subr.bf16.mxu0 0
    %208 = vmatpush1.bf16.msra.mxu0 %v185
    %209 = vmatprep.subr.bf16.mxu0 0
    %210 = vmatpush1.bf16.msra.mxu0 %v186
    %211 = vmatprep.subr.bf16.mxu0 0
    %212 = vmatpush1.bf16.msra.mxu0 0
    %213 = vmatprep.subr.bf16.mxu0 0
    %214 = vmatpush1.bf16.msra.mxu0 0
    %215 = vmatprep.subr.bf16.mxu0 0
    %216 = vmatpush1.bf16.msra.mxu0 0
    %217 = vmatprep.subr.bf16.mxu0 0
    %218 = vmatpush1.bf16.msra.mxu0 0
    %219 = vmatprep.subr.bf16.mxu0 0
    %220 = vmatpush1.bf16.msra.mxu0 0
    %221 = vmatprep.subr.bf16.mxu0 0
    %222 = vmatpush1.bf16.msra.mxu0 0
    %223 = vmatprep.subr.bf16.mxu0 0
    %224 = vmatpush1.bf16.msra.mxu0 0
    %225 = vmatprep.subr.bf16.mxu0 0
    %226 = vmatpush1.bf16.msra.mxu0 0
    %227 = vmatprep.mubr.bf16.mxu0 0
    %228 = vmatmul.mubr.bf16.gmra.mrb[0].mxu0 %v143
    %v229 = vpop.f32.mrb[0].mxu0
    %v230 = vadd.f32 %v133, %v229
    %v231 = vpop.f32.mrb[0].mxu0
    %v232 = vpop.f32.mrb[0].mxu0
    %v233 = vadd.f32 %v133, %v232
    %v234 = vpop.f32.mrb[0].mxu0
    %235 = vmatprep.mubr.bf16.mxu0 0
    %236 = vmatmul.mubr.bf16.gmra.mrb[0].mxu0 %v144
    %v237 = vpop.f32.mrb[0].mxu0
    %v238 = vadd.f32 %v133, %v237
    %v239 = vpop.f32.mrb[0].mxu0
    %v240 = vpop.f32.mrb[0].mxu0
    %v241 = vadd.f32 %v133, %v240
    %v242 = vpop.f32.mrb[0].mxu0
    %243 = vdwg.mxu0
    %244 = vst [vmem:[#allocation7] sm:$0xff] %v230
    %245 = vst [vmem:[#allocation7 + $0x8] sm:$0xff] %v233
    %246 = vst [vmem:[#allocation7 + $0x10] sm:$0xff] %v238
    %247 = vst [vmem:[#allocation7 + $0x18] sm:$0xff] %v241
    // Predicated region
    $region14: #{patch_embed.2} parent=1 // pred_check
      _
    $region15: #{patch_embed.2} parent=1 // pred_check_branch
      %249 = sbr.rel (0) target = $region17
    $region16: #{patch_embed.2} parent=1 // pred_region
      %s251 = ssub.s32 512, 512
      %252 = vsyncadd [#allocation8], %s251
      %s253 = sshll.u32 [#allocation7], 4
      %s254 = int_to_ptr.vmem [resolvable:$true] %s253
      %259 = dma.vmem_to_hbm [thread:$0]  %s254, 512, %s4, [#allocation8], 128, 128, 8
    $region17: #{patch_embed.2} parent=1 // pred_fallthru
      _
    // Predicated region
    $region18: #{patch_embed.2} parent=1 // pred_check
      _
    $region19: #{patch_embed.2} parent=1 // pred_check_branch
      %261 = sbr.rel (0) target = $region21
    $region20: #{patch_embed.2} parent=1 // pred_region
      %262 = dma.done [#allocation8], 512
    $region21: #{patch_embed.2} parent=1 // pred_fallthru
      _
    %263 = vsyncpa [#allocation8], 1

</llo_original>
